<compile_context>
chip_gen: v6e
topology: v6e:2x2x1
jax: 0.10.0
libtpu: 0.0.40
codegen_flags: <defaults>
</compile_context>

<pallas_src>
import jax
import jax.numpy as jnp
from jax.experimental import pallas as pl
from jax.experimental.pallas import tpu as pltpu


def rnn_kernel(ids_ref, proj_ref, whh_t_ref, wfc_t_ref, bfc_ref, out_ref, xproj_ref):
    # ids_ref:   (S, B)    int32 token ids (SMEM, scalar reads)
    # proj_ref:  (V, H)    fused table emb @ W_ih^T + (b_ih + b_hh)   (VMEM)
    # whh_t_ref: (H, H)    W_hh^T (pre-transposed)                    (VMEM)
    # wfc_t_ref: (H, O)    W_fc^T                                     (VMEM)
    # bfc_ref:   (1, O)                                               (VMEM)
    # out_ref:   (B, O)
    # xproj_ref: (S, B, H) scratch, time on the untiled leading axis
    S, B, H = xproj_ref.shape

    # Prologue gather: pull the pre-projected embedding row for every (t, b) token
    # directly from the VMEM table (replaces the XLA embedding gather + the hoisted
    # in-kernel input-projection matmul).  Off the recurrent dependency chain.
    for t in range(S):
        for b in range(B):
            idx = ids_ref[t, b]
            xproj_ref[t, pl.ds(b, 1), :] = proj_ref[pl.ds(idx, 1), :]

    whh_t = whh_t_ref[...]  # (H, H), already transposed -> no in-kernel XLU transpose

    # Recurrence: h_t = tanh(xproj[t] + h_{t-1} @ W_hh^T), h_0 = 0 so step 0 needs no
    # matmul.  Static unroll; each xproj_ref[t] is a tile-aligned leading-axis slab.
    h = jnp.tanh(xproj_ref[0])
    for t in range(1, S):
        h = jnp.tanh(xproj_ref[t] +
                     jnp.dot(h, whh_t, preferred_element_type=jnp.float32))

    # Final FC on the last hidden state (== fc(hidden.squeeze(0)) in the PyTorch module).
    out_ref[...] = (jnp.dot(h, wfc_t_ref[...], preferred_element_type=jnp.float32)
                    + bfc_ref[...])


def rnn_forward(x_ids, emb_table, w_ih, w_hh, b_ih, b_hh, w_fc, b_fc):
    S, B = x_ids.shape
    V, _ = emb_table.shape
    H = w_hh.shape[0]
    O = w_fc.shape[0]
    f32 = jnp.float32

    # Fused embedding + input projection + both biases: one tiny one-time matmul in the
    # wrapper; the (V, H) table (6.4 KiB here) lives in VMEM for the kernel's gather.
    proj_table = (emb_table.astype(f32) @ w_ih.T.astype(f32)
                  + (b_ih + b_hh).astype(f32))

    flops = 2 * (S - 1) * B * H * H + 2 * B * H * O + S * B * H
    bytes_accessed = 4 * (S * B + V * H + H * H + H * O + O + B * O)

    vmem = pl.BlockSpec(memory_space=pltpu.MemorySpace.VMEM)
    smem = pl.BlockSpec(memory_space=pltpu.MemorySpace.SMEM)

    return pl.pallas_call(
        rnn_kernel,
        out_shape=jax.ShapeDtypeStruct((B, O), f32),
        in_specs=[smem, vmem, vmem, vmem, vmem],
        out_specs=vmem,
        scratch_shapes=[pltpu.VMEM((S, B, H), f32)],
        cost_estimate=pl.CostEstimate(flops=flops,
                                      transcendentals=S * B * H,
                                      bytes_accessed=bytes_accessed),
    )(x_ids.astype(jnp.int32),      # (S, B) token ids -> SMEM
      proj_table,                    # (V, H)
      w_hh.T.astype(f32),            # (H, H)
      w_fc.T.astype(f32),            # (H, O)
      b_fc.reshape(1, O).astype(f32))


def rnn_reference(x_ids, emb_table, w_ih, w_hh, b_ih, b_hh, w_fc, b_fc):
    embedded = emb_table[x_ids].astype(jnp.float32)
    S, B, _ = embedded.shape
    H = w_hh.shape[0]
    h = jnp.zeros((B, H), jnp.float32)
    for t in range(S):
        h = jnp.tanh(embedded[t] @ w_ih.T + b_ih + h @ w_hh.T + b_hh)
    return h @ w_fc.T + b_fc


if __name__ == "__main__":
    # Small shapes consistent with the module.
    input_dim = 50        # vocab size
    embedding_dim = 16
    hidden_dim = 32
    output_dim = 4
    seq_len, batch = 8, 2

    key = jax.random.PRNGKey(0)
    k_x, k_emb, k_wih, k_whh, k_bih, k_bhh, k_wfc, k_bfc = jax.random.split(key, 8)

    x_ids = jax.random.randint(k_x, (seq_len, batch), 0, input_dim, dtype=jnp.int32)

    # Deterministic synthetic parameter init (shapes follow the PyTorch module).
    emb_table = jax.random.normal(k_emb, (input_dim, embedding_dim), jnp.float32) * 0.1
    w_ih = jax.random.normal(k_wih, (hidden_dim, embedding_dim), jnp.float32) * 0.1
    w_hh = jax.random.normal(k_whh, (hidden_dim, hidden_dim), jnp.float32) * 0.1
    b_ih = jax.random.normal(k_bih, (hidden_dim,), jnp.float32) * 0.1
    b_hh = jax.random.normal(k_bhh, (hidden_dim,), jnp.float32) * 0.1
    w_fc = jax.random.normal(k_wfc, (output_dim, hidden_dim), jnp.float32) * 0.1
    b_fc = jax.random.normal(k_bfc, (output_dim,), jnp.float32) * 0.1

    out = rnn_forward(x_ids, emb_table, w_ih, w_hh, b_ih, b_hh, w_fc, b_fc)
    out = jax.block_until_ready(out)

    ref = rnn_reference(x_ids, emb_table, w_ih, w_hh, b_ih, b_hh, w_fc, b_fc)
    assert out.shape == (batch, output_dim)
    assert jnp.allclose(out, ref, atol=1e-5, rtol=1e-5)

    print("KERNEL_OK")
</pallas_src>

<mosaic_0001>
module attributes {stable_mosaic.version = 11 : i64} {
  func.func @rnn_kernel(%arg0: memref<8x2xi32, #tpu.memory_space<smem>>, %arg1: memref<50x32xf32, #tpu.memory_space<vmem>>, %arg2: memref<32x32xf32, #tpu.memory_space<vmem>>, %arg3: memref<32x4xf32, #tpu.memory_space<vmem>>, %arg4: memref<1x4xf32, #tpu.memory_space<vmem>>, %arg5: memref<2x4xf32, #tpu.memory_space<vmem>>, %arg6: memref<8x2x32xf32, #tpu.memory_space<vmem>>) attributes {dimension_semantics = [], scalar_prefetch = 0 : i64, scratch_operands = 1 : i64, tpu.core_type = #tpu.core_type<tc>} {
    %c0 = arith.constant 0 : index
    %c0_0 = arith.constant 0 : index
    %0 = memref.load %arg0[%c0, %c0_0] : memref<8x2xi32, #tpu.memory_space<smem>>
    %1 = arith.index_cast %0 : i32 to index
    %c0_1 = arith.constant 0 : index
    %2 = vector.load %arg1[%1, %c0_1] : memref<50x32xf32, #tpu.memory_space<vmem>>, vector<1x32xf32>
    %c0_2 = arith.constant 0 : index
    %c0_3 = arith.constant 0 : index
    %c0_4 = arith.constant 0 : index
    %3 = vector.load %arg6[%c0_2, %c0_3, %c0_4] : memref<8x2x32xf32, #tpu.memory_space<vmem>>, vector<1x1x32xf32>
    %4 = vector.shape_cast %3 : vector<1x1x32xf32> to vector<1x32xf32>
    %5 = vector.shape_cast %2 : vector<1x32xf32> to vector<1x1x32xf32>
    tpu.vector_store %arg6[%c0_2, %c0_3, %c0_4], %5 {strides = array<i32>} : memref<8x2x32xf32, #tpu.memory_space<vmem>>, vector<1x1x32xf32>,
    %c0_5 = arith.constant 0 : index
    %c1 = arith.constant 1 : index
    %6 = memref.load %arg0[%c0_5, %c1] : memref<8x2xi32, #tpu.memory_space<smem>>
    %7 = arith.index_cast %6 : i32 to index
    %c0_6 = arith.constant 0 : index
    %8 = vector.load %arg1[%7, %c0_6] : memref<50x32xf32, #tpu.memory_space<vmem>>, vector<1x32xf32>
    %c0_7 = arith.constant 0 : index
    %c1_8 = arith.constant 1 : index
    %c0_9 = arith.constant 0 : index
    %9 = vector.load %arg6[%c0_7, %c1_8, %c0_9] : memref<8x2x32xf32, #tpu.memory_space<vmem>>, vector<1x1x32xf32>
    %10 = vector.shape_cast %9 : vector<1x1x32xf32> to vector<1x32xf32>
    %11 = vector.shape_cast %8 : vector<1x32xf32> to vector<1x1x32xf32>
    tpu.vector_store %arg6[%c0_7, %c1_8, %c0_9], %11 {strides = array<i32>} : memref<8x2x32xf32, #tpu.memory_space<vmem>>, vector<1x1x32xf32>,
    %c1_10 = arith.constant 1 : index
    %c0_11 = arith.constant 0 : index
    %12 = memref.load %arg0[%c1_10, %c0_11] : memref<8x2xi32, #tpu.memory_space<smem>>
    %13 = arith.index_cast %12 : i32 to index
    %c0_12 = arith.constant 0 : index
    %14 = vector.load %arg1[%13, %c0_12] : memref<50x32xf32, #tpu.memory_space<vmem>>, vector<1x32xf32>
    %c1_13 = arith.constant 1 : index
    %c0_14 = arith.constant 0 : index
    %c0_15 = arith.constant 0 : index
    %15 = vector.load %arg6[%c1_13, %c0_14, %c0_15] : memref<8x2x32xf32, #tpu.memory_space<vmem>>, vector<1x1x32xf32>
    %16 = vector.shape_cast %15 : vector<1x1x32xf32> to vector<1x32xf32>
    %17 = vector.shape_cast %14 : vector<1x32xf32> to vector<1x1x32xf32>
    tpu.vector_store %arg6[%c1_13, %c0_14, %c0_15], %17 {strides = array<i32>} : memref<8x2x32xf32, #tpu.memory_space<vmem>>, vector<1x1x32xf32>,
    %c1_16 = arith.constant 1 : index
    %c1_17 = arith.constant 1 : index
    %18 = memref.load %arg0[%c1_16, %c1_17] : memref<8x2xi32, #tpu.memory_space<smem>>
    %19 = arith.index_cast %18 : i32 to index
    %c0_18 = arith.constant 0 : index
    %20 = vector.load %arg1[%19, %c0_18] : memref<50x32xf32, #tpu.memory_space<vmem>>, vector<1x32xf32>
    %c1_19 = arith.constant 1 : index
    %c1_20 = arith.constant 1 : index
    %c0_21 = arith.constant 0 : index
    %21 = vector.load %arg6[%c1_19, %c1_20, %c0_21] : memref<8x2x32xf32, #tpu.memory_space<vmem>>, vector<1x1x32xf32>
    %22 = vector.shape_cast %21 : vector<1x1x32xf32> to vector<1x32xf32>
    %23 = vector.shape_cast %20 : vector<1x32xf32> to vector<1x1x32xf32>
    tpu.vector_store %arg6[%c1_19, %c1_20, %c0_21], %23 {strides = array<i32>} : memref<8x2x32xf32, #tpu.memory_space<vmem>>, vector<1x1x32xf32>,
    %c2 = arith.constant 2 : index
    %c0_22 = arith.constant 0 : index
    %24 = memref.load %arg0[%c2, %c0_22] : memref<8x2xi32, #tpu.memory_space<smem>>
    %25 = arith.index_cast %24 : i32 to index
    %c0_23 = arith.constant 0 : index
    %26 = vector.load %arg1[%25, %c0_23] : memref<50x32xf32, #tpu.memory_space<vmem>>, vector<1x32xf32>
    %c2_24 = arith.constant 2 : index
    %c0_25 = arith.constant 0 : index
    %c0_26 = arith.constant 0 : index
    %27 = vector.load %arg6[%c2_24, %c0_25, %c0_26] : memref<8x2x32xf32, #tpu.memory_space<vmem>>, vector<1x1x32xf32>
    %28 = vector.shape_cast %27 : vector<1x1x32xf32> to vector<1x32xf32>
    %29 = vector.shape_cast %26 : vector<1x32xf32> to vector<1x1x32xf32>
    tpu.vector_store %arg6[%c2_24, %c0_25, %c0_26], %29 {strides = array<i32>} : memref<8x2x32xf32, #tpu.memory_space<vmem>>, vector<1x1x32xf32>,
    %c2_27 = arith.constant 2 : index
    %c1_28 = arith.constant 1 : index
    %30 = memref.load %arg0[%c2_27, %c1_28] : memref<8x2xi32, #tpu.memory_space<smem>>
    %31 = arith.index_cast %30 : i32 to index
    %c0_29 = arith.constant 0 : index
    %32 = vector.load %arg1[%31, %c0_29] : memref<50x32xf32, #tpu.memory_space<vmem>>, vector<1x32xf32>
    %c2_30 = arith.constant 2 : index
    %c1_31 = arith.constant 1 : index
    %c0_32 = arith.constant 0 : index
    %33 = vector.load %arg6[%c2_30, %c1_31, %c0_32] : memref<8x2x32xf32, #tpu.memory_space<vmem>>, vector<1x1x32xf32>
    %34 = vector.shape_cast %33 : vector<1x1x32xf32> to vector<1x32xf32>
    %35 = vector.shape_cast %32 : vector<1x32xf32> to vector<1x1x32xf32>
    tpu.vector_store %arg6[%c2_30, %c1_31, %c0_32], %35 {strides = array<i32>} : memref<8x2x32xf32, #tpu.memory_space<vmem>>, vector<1x1x32xf32>,
    %c3 = arith.constant 3 : index
    %c0_33 = arith.constant 0 : index
    %36 = memref.load %arg0[%c3, %c0_33] : memref<8x2xi32, #tpu.memory_space<smem>>
    %37 = arith.index_cast %36 : i32 to index
    %c0_34 = arith.constant 0 : index
    %38 = vector.load %arg1[%37, %c0_34] : memref<50x32xf32, #tpu.memory_space<vmem>>, vector<1x32xf32>
    %c3_35 = arith.constant 3 : index
    %c0_36 = arith.constant 0 : index
    %c0_37 = arith.constant 0 : index
    %39 = vector.load %arg6[%c3_35, %c0_36, %c0_37] : memref<8x2x32xf32, #tpu.memory_space<vmem>>, vector<1x1x32xf32>
    %40 = vector.shape_cast %39 : vector<1x1x32xf32> to vector<1x32xf32>
    %41 = vector.shape_cast %38 : vector<1x32xf32> to vector<1x1x32xf32>
    tpu.vector_store %arg6[%c3_35, %c0_36, %c0_37], %41 {strides = array<i32>} : memref<8x2x32xf32, #tpu.memory_space<vmem>>, vector<1x1x32xf32>,
    %c3_38 = arith.constant 3 : index
    %c1_39 = arith.constant 1 : index
    %42 = memref.load %arg0[%c3_38, %c1_39] : memref<8x2xi32, #tpu.memory_space<smem>>
    %43 = arith.index_cast %42 : i32 to index
    %c0_40 = arith.constant 0 : index
    %44 = vector.load %arg1[%43, %c0_40] : memref<50x32xf32, #tpu.memory_space<vmem>>, vector<1x32xf32>
    %c3_41 = arith.constant 3 : index
    %c1_42 = arith.constant 1 : index
    %c0_43 = arith.constant 0 : index
    %45 = vector.load %arg6[%c3_41, %c1_42, %c0_43] : memref<8x2x32xf32, #tpu.memory_space<vmem>>, vector<1x1x32xf32>
    %46 = vector.shape_cast %45 : vector<1x1x32xf32> to vector<1x32xf32>
    %47 = vector.shape_cast %44 : vector<1x32xf32> to vector<1x1x32xf32>
    tpu.vector_store %arg6[%c3_41, %c1_42, %c0_43], %47 {strides = array<i32>} : memref<8x2x32xf32, #tpu.memory_space<vmem>>, vector<1x1x32xf32>,
    %c4 = arith.constant 4 : index
    %c0_44 = arith.constant 0 : index
    %48 = memref.load %arg0[%c4, %c0_44] : memref<8x2xi32, #tpu.memory_space<smem>>
    %49 = arith.index_cast %48 : i32 to index
    %c0_45 = arith.constant 0 : index
    %50 = vector.load %arg1[%49, %c0_45] : memref<50x32xf32, #tpu.memory_space<vmem>>, vector<1x32xf32>
    %c4_46 = arith.constant 4 : index
    %c0_47 = arith.constant 0 : index
    %c0_48 = arith.constant 0 : index
    %51 = vector.load %arg6[%c4_46, %c0_47, %c0_48] : memref<8x2x32xf32, #tpu.memory_space<vmem>>, vector<1x1x32xf32>
    %52 = vector.shape_cast %51 : vector<1x1x32xf32> to vector<1x32xf32>
    %53 = vector.shape_cast %50 : vector<1x32xf32> to vector<1x1x32xf32>
    tpu.vector_store %arg6[%c4_46, %c0_47, %c0_48], %53 {strides = array<i32>} : memref<8x2x32xf32, #tpu.memory_space<vmem>>, vector<1x1x32xf32>,
    %c4_49 = arith.constant 4 : index
    %c1_50 = arith.constant 1 : index
    %54 = memref.load %arg0[%c4_49, %c1_50] : memref<8x2xi32, #tpu.memory_space<smem>>
    %55 = arith.index_cast %54 : i32 to index
    %c0_51 = arith.constant 0 : index
    %56 = vector.load %arg1[%55, %c0_51] : memref<50x32xf32, #tpu.memory_space<vmem>>, vector<1x32xf32>
    %c4_52 = arith.constant 4 : index
    %c1_53 = arith.constant 1 : index
    %c0_54 = arith.constant 0 : index
    %57 = vector.load %arg6[%c4_52, %c1_53, %c0_54] : memref<8x2x32xf32, #tpu.memory_space<vmem>>, vector<1x1x32xf32>
    %58 = vector.shape_cast %57 : vector<1x1x32xf32> to vector<1x32xf32>
    %59 = vector.shape_cast %56 : vector<1x32xf32> to vector<1x1x32xf32>
    tpu.vector_store %arg6[%c4_52, %c1_53, %c0_54], %59 {strides = array<i32>} : memref<8x2x32xf32, #tpu.memory_space<vmem>>, vector<1x1x32xf32>,
    %c5 = arith.constant 5 : index
    %c0_55 = arith.constant 0 : index
    %60 = memref.load %arg0[%c5, %c0_55] : memref<8x2xi32, #tpu.memory_space<smem>>
    %61 = arith.index_cast %60 : i32 to index
    %c0_56 = arith.constant 0 : index
    %62 = vector.load %arg1[%61, %c0_56] : memref<50x32xf32, #tpu.memory_space<vmem>>, vector<1x32xf32>
    %c5_57 = arith.constant 5 : index
    %c0_58 = arith.constant 0 : index
    %c0_59 = arith.constant 0 : index
    %63 = vector.load %arg6[%c5_57, %c0_58, %c0_59] : memref<8x2x32xf32, #tpu.memory_space<vmem>>, vector<1x1x32xf32>
    %64 = vector.shape_cast %63 : vector<1x1x32xf32> to vector<1x32xf32>
    %65 = vector.shape_cast %62 : vector<1x32xf32> to vector<1x1x32xf32>
    tpu.vector_store %arg6[%c5_57, %c0_58, %c0_59], %65 {strides = array<i32>} : memref<8x2x32xf32, #tpu.memory_space<vmem>>, vector<1x1x32xf32>,
    %c5_60 = arith.constant 5 : index
    %c1_61 = arith.constant 1 : index
    %66 = memref.load %arg0[%c5_60, %c1_61] : memref<8x2xi32, #tpu.memory_space<smem>>
    %67 = arith.index_cast %66 : i32 to index
    %c0_62 = arith.constant 0 : index
    %68 = vector.load %arg1[%67, %c0_62] : memref<50x32xf32, #tpu.memory_space<vmem>>, vector<1x32xf32>
    %c5_63 = arith.constant 5 : index
    %c1_64 = arith.constant 1 : index
    %c0_65 = arith.constant 0 : index
    %69 = vector.load %arg6[%c5_63, %c1_64, %c0_65] : memref<8x2x32xf32, #tpu.memory_space<vmem>>, vector<1x1x32xf32>
    %70 = vector.shape_cast %69 : vector<1x1x32xf32> to vector<1x32xf32>
    %71 = vector.shape_cast %68 : vector<1x32xf32> to vector<1x1x32xf32>
    tpu.vector_store %arg6[%c5_63, %c1_64, %c0_65], %71 {strides = array<i32>} : memref<8x2x32xf32, #tpu.memory_space<vmem>>, vector<1x1x32xf32>,
    %c6 = arith.constant 6 : index
    %c0_66 = arith.constant 0 : index
    %72 = memref.load %arg0[%c6, %c0_66] : memref<8x2xi32, #tpu.memory_space<smem>>
    %73 = arith.index_cast %72 : i32 to index
    %c0_67 = arith.constant 0 : index
    %74 = vector.load %arg1[%73, %c0_67] : memref<50x32xf32, #tpu.memory_space<vmem>>, vector<1x32xf32>
    %c6_68 = arith.constant 6 : index
    %c0_69 = arith.constant 0 : index
    %c0_70 = arith.constant 0 : index
    %75 = vector.load %arg6[%c6_68, %c0_69, %c0_70] : memref<8x2x32xf32, #tpu.memory_space<vmem>>, vector<1x1x32xf32>
    %76 = vector.shape_cast %75 : vector<1x1x32xf32> to vector<1x32xf32>
    %77 = vector.shape_cast %74 : vector<1x32xf32> to vector<1x1x32xf32>
    tpu.vector_store %arg6[%c6_68, %c0_69, %c0_70], %77 {strides = array<i32>} : memref<8x2x32xf32, #tpu.memory_space<vmem>>, vector<1x1x32xf32>,
    %c6_71 = arith.constant 6 : index
    %c1_72 = arith.constant 1 : index
    %78 = memref.load %arg0[%c6_71, %c1_72] : memref<8x2xi32, #tpu.memory_space<smem>>
    %79 = arith.index_cast %78 : i32 to index
    %c0_73 = arith.constant 0 : index
    %80 = vector.load %arg1[%79, %c0_73] : memref<50x32xf32, #tpu.memory_space<vmem>>, vector<1x32xf32>
    %c6_74 = arith.constant 6 : index
    %c1_75 = arith.constant 1 : index
    %c0_76 = arith.constant 0 : index
    %81 = vector.load %arg6[%c6_74, %c1_75, %c0_76] : memref<8x2x32xf32, #tpu.memory_space<vmem>>, vector<1x1x32xf32>
    %82 = vector.shape_cast %81 : vector<1x1x32xf32> to vector<1x32xf32>
    %83 = vector.shape_cast %80 : vector<1x32xf32> to vector<1x1x32xf32>
    tpu.vector_store %arg6[%c6_74, %c1_75, %c0_76], %83 {strides = array<i32>} : memref<8x2x32xf32, #tpu.memory_space<vmem>>, vector<1x1x32xf32>,
    %c7 = arith.constant 7 : index
    %c0_77 = arith.constant 0 : index
    %84 = memref.load %arg0[%c7, %c0_77] : memref<8x2xi32, #tpu.memory_space<smem>>
    %85 = arith.index_cast %84 : i32 to index
    %c0_78 = arith.constant 0 : index
    %86 = vector.load %arg1[%85, %c0_78] : memref<50x32xf32, #tpu.memory_space<vmem>>, vector<1x32xf32>
    %c7_79 = arith.constant 7 : index
    %c0_80 = arith.constant 0 : index
    %c0_81 = arith.constant 0 : index
    %87 = vector.load %arg6[%c7_79, %c0_80, %c0_81] : memref<8x2x32xf32, #tpu.memory_space<vmem>>, vector<1x1x32xf32>
    %88 = vector.shape_cast %87 : vector<1x1x32xf32> to vector<1x32xf32>
    %89 = vector.shape_cast %86 : vector<1x32xf32> to vector<1x1x32xf32>
    tpu.vector_store %arg6[%c7_79, %c0_80, %c0_81], %89 {strides = array<i32>} : memref<8x2x32xf32, #tpu.memory_space<vmem>>, vector<1x1x32xf32>,
    %c7_82 = arith.constant 7 : index
    %c1_83 = arith.constant 1 : index
    %90 = memref.load %arg0[%c7_82, %c1_83] : memref<8x2xi32, #tpu.memory_space<smem>>
    %91 = arith.index_cast %90 : i32 to index
    %c0_84 = arith.constant 0 : index
    %92 = vector.load %arg1[%91, %c0_84] : memref<50x32xf32, #tpu.memory_space<vmem>>, vector<1x32xf32>
    %c7_85 = arith.constant 7 : index
    %c1_86 = arith.constant 1 : index
    %c0_87 = arith.constant 0 : index
    %93 = vector.load %arg6[%c7_85, %c1_86, %c0_87] : memref<8x2x32xf32, #tpu.memory_space<vmem>>, vector<1x1x32xf32>
    %94 = vector.shape_cast %93 : vector<1x1x32xf32> to vector<1x32xf32>
    %95 = vector.shape_cast %92 : vector<1x32xf32> to vector<1x1x32xf32>
    tpu.vector_store %arg6[%c7_85, %c1_86, %c0_87], %95 {strides = array<i32>} : memref<8x2x32xf32, #tpu.memory_space<vmem>>, vector<1x1x32xf32>,
    %c0_88 = arith.constant 0 : index
    %c0_89 = arith.constant 0 : index
    %96 = vector.load %arg2[%c0_88, %c0_89] : memref<32x32xf32, #tpu.memory_space<vmem>>, vector<32x32xf32>
    %c0_90 = arith.constant 0 : index
    %c0_91 = arith.constant 0 : index
    %c0_92 = arith.constant 0 : index
    %97 = vector.load %arg6[%c0_90, %c0_91, %c0_92] : memref<8x2x32xf32, #tpu.memory_space<vmem>>, vector<1x2x32xf32>
    %98 = vector.shape_cast %97 : vector<1x2x32xf32> to vector<2x32xf32>
    %99 = math.tanh %98 : vector<2x32xf32>
    %c1_93 = arith.constant 1 : index
    %c0_94 = arith.constant 0 : index
    %c0_95 = arith.constant 0 : index
    %100 = vector.load %arg6[%c1_93, %c0_94, %c0_95] : memref<8x2x32xf32, #tpu.memory_space<vmem>>, vector<1x2x32xf32>
    %101 = vector.shape_cast %100 : vector<1x2x32xf32> to vector<2x32xf32>
    %cst = arith.constant dense<0.000000e+00> : vector<2x32xf32>
    %102 = tpu.matmul %99, %96, %cst {dimension_numbers = #tpu.dot_dimension_numbers<[1], [0], [0], [1], [0, 0, 1, 1], [], []>} : vector<2x32xf32>, vector<32x32xf32>, vector<2x32xf32> -> vector<2x32xf32>
    %103 = arith.addf %101, %102 : vector<2x32xf32>
    %104 = math.tanh %103 : vector<2x32xf32>
    %c2_96 = arith.constant 2 : index
    %c0_97 = arith.constant 0 : index
    %c0_98 = arith.constant 0 : index
    %105 = vector.load %arg6[%c2_96, %c0_97, %c0_98] : memref<8x2x32xf32, #tpu.memory_space<vmem>>, vector<1x2x32xf32>
    %106 = vector.shape_cast %105 : vector<1x2x32xf32> to vector<2x32xf32>
    %cst_99 = arith.constant dense<0.000000e+00> : vector<2x32xf32>
    %107 = tpu.matmul %104, %96, %cst_99 {dimension_numbers = #tpu.dot_dimension_numbers<[1], [0], [0], [1], [0, 0, 1, 1], [], []>} : vector<2x32xf32>, vector<32x32xf32>, vector<2x32xf32> -> vector<2x32xf32>
    %108 = arith.addf %106, %107 : vector<2x32xf32>
    %109 = math.tanh %108 : vector<2x32xf32>
    %c3_100 = arith.constant 3 : index
    %c0_101 = arith.constant 0 : index
    %c0_102 = arith.constant 0 : index
    %110 = vector.load %arg6[%c3_100, %c0_101, %c0_102] : memref<8x2x32xf32, #tpu.memory_space<vmem>>, vector<1x2x32xf32>
    %111 = vector.shape_cast %110 : vector<1x2x32xf32> to vector<2x32xf32>
    %cst_103 = arith.constant dense<0.000000e+00> : vector<2x32xf32>
    %112 = tpu.matmul %109, %96, %cst_103 {dimension_numbers = #tpu.dot_dimension_numbers<[1], [0], [0], [1], [0, 0, 1, 1], [], []>} : vector<2x32xf32>, vector<32x32xf32>, vector<2x32xf32> -> vector<2x32xf32>
    %113 = arith.addf %111, %112 : vector<2x32xf32>
    %114 = math.tanh %113 : vector<2x32xf32>
    %c4_104 = arith.constant 4 : index
    %c0_105 = arith.constant 0 : index
    %c0_106 = arith.constant 0 : index
    %115 = vector.load %arg6[%c4_104, %c0_105, %c0_106] : memref<8x2x32xf32, #tpu.memory_space<vmem>>, vector<1x2x32xf32>
    %116 = vector.shape_cast %115 : vector<1x2x32xf32> to vector<2x32xf32>
    %cst_107 = arith.constant dense<0.000000e+00> : vector<2x32xf32>
    %117 = tpu.matmul %114, %96, %cst_107 {dimension_numbers = #tpu.dot_dimension_numbers<[1], [0], [0], [1], [0, 0, 1, 1], [], []>} : vector<2x32xf32>, vector<32x32xf32>, vector<2x32xf32> -> vector<2x32xf32>
    %118 = arith.addf %116, %117 : vector<2x32xf32>
    %119 = math.tanh %118 : vector<2x32xf32>
    %c5_108 = arith.constant 5 : index
    %c0_109 = arith.constant 0 : index
    %c0_110 = arith.constant 0 : index
    %120 = vector.load %arg6[%c5_108, %c0_109, %c0_110] : memref<8x2x32xf32, #tpu.memory_space<vmem>>, vector<1x2x32xf32>
    %121 = vector.shape_cast %120 : vector<1x2x32xf32> to vector<2x32xf32>
    %cst_111 = arith.constant dense<0.000000e+00> : vector<2x32xf32>
    %122 = tpu.matmul %119, %96, %cst_111 {dimension_numbers = #tpu.dot_dimension_numbers<[1], [0], [0], [1], [0, 0, 1, 1], [], []>} : vector<2x32xf32>, vector<32x32xf32>, vector<2x32xf32> -> vector<2x32xf32>
    %123 = arith.addf %121, %122 : vector<2x32xf32>
    %124 = math.tanh %123 : vector<2x32xf32>
    %c6_112 = arith.constant 6 : index
    %c0_113 = arith.constant 0 : index
    %c0_114 = arith.constant 0 : index
    %125 = vector.load %arg6[%c6_112, %c0_113, %c0_114] : memref<8x2x32xf32, #tpu.memory_space<vmem>>, vector<1x2x32xf32>
    %126 = vector.shape_cast %125 : vector<1x2x32xf32> to vector<2x32xf32>
    %cst_115 = arith.constant dense<0.000000e+00> : vector<2x32xf32>
    %127 = tpu.matmul %124, %96, %cst_115 {dimension_numbers = #tpu.dot_dimension_numbers<[1], [0], [0], [1], [0, 0, 1, 1], [], []>} : vector<2x32xf32>, vector<32x32xf32>, vector<2x32xf32> -> vector<2x32xf32>
    %128 = arith.addf %126, %127 : vector<2x32xf32>
    %129 = math.tanh %128 : vector<2x32xf32>
    %c7_116 = arith.constant 7 : index
    %c0_117 = arith.constant 0 : index
    %c0_118 = arith.constant 0 : index
    %130 = vector.load %arg6[%c7_116, %c0_117, %c0_118] : memref<8x2x32xf32, #tpu.memory_space<vmem>>, vector<1x2x32xf32>
    %131 = vector.shape_cast %130 : vector<1x2x32xf32> to vector<2x32xf32>
    %cst_119 = arith.constant dense<0.000000e+00> : vector<2x32xf32>
    %132 = tpu.matmul %129, %96, %cst_119 {dimension_numbers = #tpu.dot_dimension_numbers<[1], [0], [0], [1], [0, 0, 1, 1], [], []>} : vector<2x32xf32>, vector<32x32xf32>, vector<2x32xf32> -> vector<2x32xf32>
    %133 = arith.addf %131, %132 : vector<2x32xf32>
    %134 = math.tanh %133 : vector<2x32xf32>
    %c0_120 = arith.constant 0 : index
    %c0_121 = arith.constant 0 : index
    %135 = vector.load %arg3[%c0_120, %c0_121] : memref<32x4xf32, #tpu.memory_space<vmem>>, vector<32x4xf32>
    %cst_122 = arith.constant dense<0.000000e+00> : vector<2x4xf32>
    %136 = tpu.matmul %134, %135, %cst_122 {dimension_numbers = #tpu.dot_dimension_numbers<[1], [0], [0], [1], [0, 0, 1, 1], [], []>} : vector<2x32xf32>, vector<32x4xf32>, vector<2x4xf32> -> vector<2x4xf32>
    %c0_123 = arith.constant 0 : index
    %c0_124 = arith.constant 0 : index
    %137 = vector.load %arg4[%c0_123, %c0_124] : memref<1x4xf32, #tpu.memory_space<vmem>>, vector<1x4xf32>
    %138 = vector.broadcast %137 : vector<1x4xf32> to vector<2x4xf32>
    %139 = arith.addf %136, %138 : vector<2x4xf32>
    %c0_125 = arith.constant 0 : index
    %c0_126 = arith.constant 0 : index
    %140 = vector.load %arg5[%c0_125, %c0_126] : memref<2x4xf32, #tpu.memory_space<vmem>>, vector<2x4xf32>
    tpu.vector_store %arg5[%c0_125, %c0_126], %139 {strides = array<i32>} : memref<2x4xf32, #tpu.memory_space<vmem>>, vector<2x4xf32>,
    return
  }
}

</mosaic_0001>

<llo_original>
// kernel: tpu_custom_call.1
$region0: #{tpu_custom_call.1}
  #allocation0 [shape = 'u32[]', space=smem, size = 0x4, offset = 0x4, fixed_abs, tag = 'smem constant byte address 0x4 - core index']
  #allocation1 [shape = 'u32[144,128]{1,0:T(1,128)}', space=vmem, size = 0x12000, scoped, tag = 'internal scratch']
  #allocation2 [shape = 'f32[8,2,32]{2,1,0:T(2,128)}', space=vmem, size = 0x2000, scoped, tag = 'scratch operand']
  %s0 = inlined_call_operand.vmem [shape: s32[8,2], index: 0, kind: input, shape index: {}]
  %s1 = inlined_call_operand.vmem [shape: f32[50,32], index: 1, kind: input, shape index: {}]
  %s2 = inlined_call_operand.vmem [shape: f32[32,32], index: 2, kind: input, shape index: {}]
  %s3 = inlined_call_operand.vmem [shape: f32[32,4], index: 3, kind: input, shape index: {}]
  %s4 = inlined_call_operand.vmem [shape: f32[1,4], index: 4, kind: input, shape index: {}]
  %s5 = inlined_call_operand.hbm [shape: f32[2,4], index: 5, kind: output, shape index: {}]
  %s6 = sld [smem:[#allocation0]]
  $region34: #{tpu_custom_call.1} parent=0
    _
  %s8 = ssub.s32 1, %s6
  %s9 = scalar_select 0, %s8, %s6
  $region1: #{tpu_custom_call.1} parent=0
    #allocation3 [shape = 'u8[4096]{0}', space=smem, size = 0x1000, scoped, tag = 'input window, operand 0, single buffered']
    #allocation4 [shape = 's32[1]{0}', space=sflag, size = 0x4, scoped, tag = 'scoped memory for tpu_custom_call.1']
    #allocation5 [shape = 's32[1]{0}', space=sflag, size = 0x4, scoped, tag = 'scoped memory for tpu_custom_call.1']
    #allocation6 [shape = 'u8[1024]{0}', space=vmem, size = 0x400, scoped, tag = 'output window, operand 0, single buffered']
    %10 = vsyncpa [#allocation5], 0
    %11 = vsyncpa [#allocation4], 0
    // Predicated region
    $region2: #{tpu_custom_call.1} parent=1 // pred_check
      _
    $region3: #{tpu_custom_call.1} parent=1 // pred_check_branch
      %13 = sbr.rel (0) target = $region5
    $region4: #{tpu_custom_call.1} parent=1 // pred_region
      %s15 = ssub.s32 128, 128
      %16 = vsyncadd [#allocation5], %s15
      %s18 = sshll.u32 %s0, 4
      %s19 = int_to_ptr.vmem [resolvable:$true] %s18
      %21 = dma.vmem_to_smem %s19, 128, [#allocation3], [#allocation5]
    $region5: #{tpu_custom_call.1} parent=1 // pred_fallthru
      _
    // Predicated region
    $region6: #{tpu_custom_call.1} parent=1 // pred_check
      _
    $region7: #{tpu_custom_call.1} parent=1 // pred_check_branch
      %23 = sbr.rel (0) target = $region9
    $region8: #{tpu_custom_call.1} parent=1 // pred_region
      _
    $region9: #{tpu_custom_call.1} parent=1 // pred_fallthru
      _
    // Predicated region
    $region10: #{tpu_custom_call.1} parent=1 // pred_check
      _
    $region11: #{tpu_custom_call.1} parent=1 // pred_check_branch
      %25 = sbr.rel (0) target = $region13
    $region12: #{tpu_custom_call.1} parent=1 // pred_region
      _
    $region13: #{tpu_custom_call.1} parent=1 // pred_fallthru
      _
    // Predicated region
    $region14: #{tpu_custom_call.1} parent=1 // pred_check
      _
    $region15: #{tpu_custom_call.1} parent=1 // pred_check_branch
      %27 = sbr.rel (0) target = $region17
    $region16: #{tpu_custom_call.1} parent=1 // pred_region
      _
    $region17: #{tpu_custom_call.1} parent=1 // pred_fallthru
      _
    // Predicated region
    $region18: #{tpu_custom_call.1} parent=1 // pred_check
      _
    $region19: #{tpu_custom_call.1} parent=1 // pred_check_branch
      %29 = sbr.rel (0) target = $region21
    $region20: #{tpu_custom_call.1} parent=1 // pred_region
      _
    $region21: #{tpu_custom_call.1} parent=1 // pred_fallthru
      _
    // Predicated region
    $region22: #{tpu_custom_call.1} parent=1 // pred_check
      _
    $region23: #{tpu_custom_call.1} parent=1 // pred_check_branch
      %31 = sbr.rel (0) target = $region25
    $region24: #{tpu_custom_call.1} parent=1 // pred_region
      %32 = dma.done [#allocation5], 128
    $region25: #{tpu_custom_call.1} parent=1 // pred_fallthru
      _
    %33 = sfence
    %s34 = sld [smem:[#allocation3]]
    %s35 = scalar_lea.vmem %s1, %s34
    %v36 = vld [vmem:[%s35] sm:$0x1]
    %vm37 = vcmask 253952
    %38 = vst.msk [vmem:[#allocation2] sm:$0x1] %vm37, %v36
    %s39 = sld [smem:[#allocation3 + $0x1]]
    %s40 = scalar_lea.vmem %s1, %s39
    %v41 = vld [vmem:[%s40] sm:$0x1]
    %42 = vst.msk [vmem:[#allocation2 + $0x1] sm:$0x1] %vm37, %v41
    %s43 = sld [smem:[#allocation3 + $0x80]]
    %s44 = scalar_lea.vmem %s1, %s43
    %v45 = vld [vmem:[%s44] sm:$0x1]
    %s46 = scalar_lea.vmem [#allocation2], 2
    %47 = vst.msk [vmem:[%s46] sm:$0x1] %vm37, %v45
    %s48 = sld [smem:[#allocation3 + $0x81]]
    %s49 = scalar_lea.vmem %s1, %s48
    %v50 = vld [vmem:[%s49] sm:$0x1]
    %51 = vst.msk [vmem:[%s46 + $0x1] sm:$0x1] %vm37, %v50
    %s52 = sld [smem:[#allocation3 + $0x100]]
    %s53 = scalar_lea.vmem %s1, %s52
    %v54 = vld [vmem:[%s53] sm:$0x1]
    %s55 = scalar_lea.vmem [#allocation2], 4
    %56 = vst.msk [vmem:[%s55] sm:$0x1] %vm37, %v54
    %s57 = sld [smem:[#allocation3 + $0x101]]
    %s58 = scalar_lea.vmem %s1, %s57
    %v59 = vld [vmem:[%s58] sm:$0x1]
    %60 = vst.msk [vmem:[%s55 + $0x1] sm:$0x1] %vm37, %v59
    %s61 = sld [smem:[#allocation3 + $0x180]]
    %s62 = scalar_lea.vmem %s1, %s61
    %v63 = vld [vmem:[%s62] sm:$0x1]
    %s64 = scalar_lea.vmem [#allocation2], 6
    %65 = vst.msk [vmem:[%s64] sm:$0x1] %vm37, %v63
    %s66 = sld [smem:[#allocation3 + $0x181]]
    %s67 = scalar_lea.vmem %s1, %s66
    %v68 = vld [vmem:[%s67] sm:$0x1]
    %69 = vst.msk [vmem:[%s64 + $0x1] sm:$0x1] %vm37, %v68
    %s70 = sld [smem:[#allocation3 + $0x200]]
    %s71 = scalar_lea.vmem %s1, %s70
    %v72 = vld [vmem:[%s71] sm:$0x1]
    %s73 = scalar_lea.vmem [#allocation2], 8
    %74 = vst.msk [vmem:[%s73] sm:$0x1] %vm37, %v72
    %s75 = sld [smem:[#allocation3 + $0x201]]
    %s76 = scalar_lea.vmem %s1, %s75
    %v77 = vld [vmem:[%s76] sm:$0x1]
    %78 = vst.msk [vmem:[%s73 + $0x1] sm:$0x1] %vm37, %v77
    %s79 = sld [smem:[#allocation3 + $0x280]]
    %s80 = scalar_lea.vmem %s1, %s79
    %v81 = vld [vmem:[%s80] sm:$0x1]
    %s82 = scalar_lea.vmem [#allocation2], 10
    %83 = vst.msk [vmem:[%s82] sm:$0x1] %vm37, %v81
    %s84 = sld [smem:[#allocation3 + $0x281]]
    %s85 = scalar_lea.vmem %s1, %s84
    %v86 = vld [vmem:[%s85] sm:$0x1]
    %87 = vst.msk [vmem:[%s82 + $0x1] sm:$0x1] %vm37, %v86
    %s88 = sld [smem:[#allocation3 + $0x300]]
    %s89 = scalar_lea.vmem %s1, %s88
    %v90 = vld [vmem:[%s89] sm:$0x1]
    %s91 = scalar_lea.vmem [#allocation2], 12
    %92 = vst.msk [vmem:[%s91] sm:$0x1] %vm37, %v90
    %s93 = sld [smem:[#allocation3 + $0x301]]
    %s94 = scalar_lea.vmem %s1, %s93
    %v95 = vld [vmem:[%s94] sm:$0x1]
    %96 = vst.msk [vmem:[%s91 + $0x1] sm:$0x1] %vm37, %v95
    %s97 = sld [smem:[#allocation3 + $0x380]]
    %s98 = scalar_lea.vmem %s1, %s97
    %v99 = vld [vmem:[%s98] sm:$0x1]
    %s100 = scalar_lea.vmem [#allocation2], 14
    %101 = vst.msk [vmem:[%s100] sm:$0x1] %vm37, %v99
    %s102 = sld [smem:[#allocation3 + $0x381]]
    %s103 = scalar_lea.vmem %s1, %s102
    %v104 = vld [vmem:[%s103] sm:$0x1]
    %105 = vst.msk [vmem:[%s100 + $0x1] sm:$0x1] %vm37, %v104
    %v106 = vld [vmem:[%s2] sm:$0xff]
    %v107 = vld [vmem:[%s2 + $0x8] sm:$0xff]
    %v108 = vld [vmem:[%s2 + $0x10] sm:$0xff]
    %v109 = vld [vmem:[%s2 + $0x18] sm:$0xff]
    %v110 = vld [vmem:[#allocation2] sm:$0x3]
    %v111 = vtanh.pop %v110
    %v112 = vld [vmem:[%s46] sm:$0x3]
    %vm113 = vcmask 261120
    %v115 = vsel %vm113, %v111, 0
    %117 = vmatprep.subr.mxu0 0.0
    %118 = vmatpush1.msra.mxu0 0.0
    %119 = vmatprep.subr.mxu0 0.0
    %120 = vmatpush1.msra.mxu0 0.0
    %121 = vmatprep.subr.mxu0 0.0
    %122 = vmatpush1.msra.mxu0 0.0
    %123 = vmatprep.subr.mxu0 0.0
    %124 = vmatpush1.msra.mxu0 0.0
    %125 = vmatprep.subr.mxu0 0.0
    %126 = vmatpush1.msra.mxu0 0.0
    %127 = vmatprep.subr.mxu0 0.0
    %128 = vmatpush1.msra.mxu0 0.0
    %129 = vmatprep.subr.mxu0 0.0
    %130 = vmatpush1.msra.mxu0 0.0
    %131 = vmatprep.subr.mxu0 0.0
    %132 = vmatpush1.msra.mxu0 0.0
    %133 = vmatprep.subr.mxu0 0.0
    %134 = vmatpush1.msra.mxu0 0.0
    %135 = vmatprep.subr.mxu0 0.0
    %136 = vmatpush1.msra.mxu0 0.0
    %137 = vmatprep.subr.mxu0 0.0
    %138 = vmatpush1.msra.mxu0 0.0
    %139 = vmatprep.subr.mxu0 0.0
    %140 = vmatpush1.msra.mxu0 0.0
    %141 = vmatprep.subr.mxu0 0.0
    %142 = vmatpush1.msra.mxu0 %v109
    %143 = vmatprep.subr.mxu0 0.0
    %144 = vmatpush1.msra.mxu0 %v108
    %145 = vmatprep.subr.mxu0 0.0
    %146 = vmatpush1.msra.mxu0 %v107
    %147 = vmatprep.subr.mxu0 0.0
    %148 = vmatpush1.msra.mxu0 %v106
    %149 = vmatprep.subr.mxu0 0.0
    %150 = vmatpush2.msra.mxu0 0.0
    %151 = vmatprep.subr.mxu0 0.0
    %152 = vmatpush2.msra.mxu0 0.0
    %153 = vmatprep.subr.mxu0 0.0
    %154 = vmatpush2.msra.mxu0 0.0
    %155 = vmatprep.subr.mxu0 0.0
    %156 = vmatpush2.msra.mxu0 0.0
    %157 = vmatprep.subr.mxu0 0.0
    %158 = vmatpush2.msra.mxu0 0.0
    %159 = vmatprep.subr.mxu0 0.0
    %160 = vmatpush2.msra.mxu0 0.0
    %161 = vmatprep.subr.mxu0 0.0
    %162 = vmatpush2.msra.mxu0 0.0
    %163 = vmatprep.subr.mxu0 0.0
    %164 = vmatpush2.msra.mxu0 0.0
    %165 = vmatprep.subr.mxu0 0.0
    %166 = vmatpush2.msra.mxu0 0.0
    %167 = vmatprep.subr.mxu0 0.0
    %168 = vmatpush2.msra.mxu0 0.0
    %169 = vmatprep.subr.mxu0 0.0
    %170 = vmatpush2.msra.mxu0 0.0
    %171 = vmatprep.subr.mxu0 0.0
    %172 = vmatpush2.msra.mxu0 0.0
    %173 = vmatprep.subr.mxu0 0.0
    %174 = vmatpush2.msra.mxu0 0.0
    %175 = vmatprep.subr.mxu0 0.0
    %176 = vmatpush2.msra.mxu0 0.0
    %177 = vmatprep.subr.mxu0 0.0
    %178 = vmatpush2.msra.mxu0 0.0
    %179 = vmatprep.subr.mxu0 0.0
    %180 = vmatpush2.msra.mxu0 0.0
    %181 = vmatprep.mubr.f32.mxu0 0.0
    %182 = vmatmul.mubr.f32.gmra.mxu0 %v115
    %v183 = vpop.f32.mrf.mxu0
    %v184 = vadd.f32 0.0, %v183
    %v185 = vpop.f32.mrf.mxu0
    %186 = vdwg.mxu0
    %v187 = vadd.f32 %v112, %v184
    %v188 = vtanh.pop %v187
    %v189 = vld [vmem:[%s55] sm:$0x3]
    %v191 = vsel %vm113, %v188, 0
    %193 = vmatprep.subr.mxu0 0.0
    %194 = vmatpush1.msra.mxu0 0.0
    %195 = vmatprep.subr.mxu0 0.0
    %196 = vmatpush1.msra.mxu0 0.0
    %197 = vmatprep.subr.mxu0 0.0
    %198 = vmatpush1.msra.mxu0 0.0
    %199 = vmatprep.subr.mxu0 0.0
    %200 = vmatpush1.msra.mxu0 0.0
    %201 = vmatprep.subr.mxu0 0.0
    %202 = vmatpush1.msra.mxu0 0.0
    %203 = vmatprep.subr.mxu0 0.0
    %204 = vmatpush1.msra.mxu0 0.0
    %205 = vmatprep.subr.mxu0 0.0
    %206 = vmatpush1.msra.mxu0 0.0
    %207 = vmatprep.subr.mxu0 0.0
    %208 = vmatpush1.msra.mxu0 0.0
    %209 = vmatprep.subr.mxu0 0.0
    %210 = vmatpush1.msra.mxu0 0.0
    %211 = vmatprep.subr.mxu0 0.0
    %212 = vmatpush1.msra.mxu0 0.0
    %213 = vmatprep.subr.mxu0 0.0
    %214 = vmatpush1.msra.mxu0 0.0
    %215 = vmatprep.subr.mxu0 0.0
    %216 = vmatpush1.msra.mxu0 0.0
    %217 = vmatprep.subr.mxu0 0.0
    %218 = vmatpush1.msra.mxu0 %v109
    %219 = vmatprep.subr.mxu0 0.0
    %220 = vmatpush1.msra.mxu0 %v108
    %221 = vmatprep.subr.mxu0 0.0
    %222 = vmatpush1.msra.mxu0 %v107
    %223 = vmatprep.subr.mxu0 0.0
    %224 = vmatpush1.msra.mxu0 %v106
    %225 = vmatprep.subr.mxu0 0.0
    %226 = vmatpush2.msra.mxu0 0.0
    %227 = vmatprep.subr.mxu0 0.0
    %228 = vmatpush2.msra.mxu0 0.0
    %229 = vmatprep.subr.mxu0 0.0
    %230 = vmatpush2.msra.mxu0 0.0
    %231 = vmatprep.subr.mxu0 0.0
    %232 = vmatpush2.msra.mxu0 0.0
    %233 = vmatprep.subr.mxu0 0.0
    %234 = vmatpush2.msra.mxu0 0.0
    %235 = vmatprep.subr.mxu0 0.0
    %236 = vmatpush2.msra.mxu0 0.0
    %237 = vmatprep.subr.mxu0 0.0
    %238 = vmatpush2.msra.mxu0 0.0
    %239 = vmatprep.subr.mxu0 0.0
    %240 = vmatpush2.msra.mxu0 0.0
    %241 = vmatprep.subr.mxu0 0.0
    %242 = vmatpush2.msra.mxu0 0.0
    %243 = vmatprep.subr.mxu0 0.0
    %244 = vmatpush2.msra.mxu0 0.0
    %245 = vmatprep.subr.mxu0 0.0
    %246 = vmatpush2.msra.mxu0 0.0
    %247 = vmatprep.subr.mxu0 0.0
    %248 = vmatpush2.msra.mxu0 0.0
    %249 = vmatprep.subr.mxu0 0.0
    %250 = vmatpush2.msra.mxu0 0.0
    %251 = vmatprep.subr.mxu0 0.0
    %252 = vmatpush2.msra.mxu0 0.0
    %253 = vmatprep.subr.mxu0 0.0
    %254 = vmatpush2.msra.mxu0 0.0
    %255 = vmatprep.subr.mxu0 0.0
    %256 = vmatpush2.msra.mxu0 0.0
    %257 = vmatprep.mubr.f32.mxu0 0.0
    %258 = vmatmul.mubr.f32.gmra.mxu0 %v191
    %v259 = vpop.f32.mrf.mxu0
    %v260 = vadd.f32 0.0, %v259
    %v261 = vpop.f32.mrf.mxu0
    %262 = vdwg.mxu0
    %v263 = vadd.f32 %v189, %v260
    %v264 = vtanh.pop %v263
    %v265 = vld [vmem:[%s64] sm:$0x3]
    %v267 = vsel %vm113, %v264, 0
    %269 = vmatprep.subr.mxu0 0.0
    %270 = vmatpush1.msra.mxu0 0.0
    %271 = vmatprep.subr.mxu0 0.0
    %272 = vmatpush1.msra.mxu0 0.0
    %273 = vmatprep.subr.mxu0 0.0
    %274 = vmatpush1.msra.mxu0 0.0
    %275 = vmatprep.subr.mxu0 0.0
    %276 = vmatpush1.msra.mxu0 0.0
    %277 = vmatprep.subr.mxu0 0.0
    %278 = vmatpush1.msra.mxu0 0.0
    %279 = vmatprep.subr.mxu0 0.0
    %280 = vmatpush1.msra.mxu0 0.0
    %281 = vmatprep.subr.mxu0 0.0
    %282 = vmatpush1.msra.mxu0 0.0
    %283 = vmatprep.subr.mxu0 0.0
    %284 = vmatpush1.msra.mxu0 0.0
    %285 = vmatprep.subr.mxu0 0.0
    %286 = vmatpush1.msra.mxu0 0.0
    %287 = vmatprep.subr.mxu0 0.0
    %288 = vmatpush1.msra.mxu0 0.0
    %289 = vmatprep.subr.mxu0 0.0
    %290 = vmatpush1.msra.mxu0 0.0
    %291 = vmatprep.subr.mxu0 0.0
    %292 = vmatpush1.msra.mxu0 0.0
    %293 = vmatprep.subr.mxu0 0.0
    %294 = vmatpush1.msra.mxu0 %v109
    %295 = vmatprep.subr.mxu0 0.0
    %296 = vmatpush1.msra.mxu0 %v108
    %297 = vmatprep.subr.mxu0 0.0
    %298 = vmatpush1.msra.mxu0 %v107
    %299 = vmatprep.subr.mxu0 0.0
    %300 = vmatpush1.msra.mxu0 %v106
    %301 = vmatprep.subr.mxu0 0.0
    %302 = vmatpush2.msra.mxu0 0.0
    %303 = vmatprep.subr.mxu0 0.0
    %304 = vmatpush2.msra.mxu0 0.0
    %305 = vmatprep.subr.mxu0 0.0
    %306 = vmatpush2.msra.mxu0 0.0
    %307 = vmatprep.subr.mxu0 0.0
    %308 = vmatpush2.msra.mxu0 0.0
    %309 = vmatprep.subr.mxu0 0.0
    %310 = vmatpush2.msra.mxu0 0.0
    %311 = vmatprep.subr.mxu0 0.0
    %312 = vmatpush2.msra.mxu0 0.0
    %313 = vmatprep.subr.mxu0 0.0
    %314 = vmatpush2.msra.mxu0 0.0
    %315 = vmatprep.subr.mxu0 0.0
    %316 = vmatpush2.msra.mxu0 0.0
    %317 = vmatprep.subr.mxu0 0.0
    %318 = vmatpush2.msra.mxu0 0.0
    %319 = vmatprep.subr.mxu0 0.0
    %320 = vmatpush2.msra.mxu0 0.0
    %321 = vmatprep.subr.mxu0 0.0
    %322 = vmatpush2.msra.mxu0 0.0
    %323 = vmatprep.subr.mxu0 0.0
    %324 = vmatpush2.msra.mxu0 0.0
    %325 = vmatprep.subr.mxu0 0.0
    %326 = vmatpush2.msra.mxu0 0.0
    %327 = vmatprep.subr.mxu0 0.0
    %328 = vmatpush2.msra.mxu0 0.0
    %329 = vmatprep.subr.mxu0 0.0
    %330 = vmatpush2.msra.mxu0 0.0
    %331 = vmatprep.subr.mxu0 0.0
    %332 = vmatpush2.msra.mxu0 0.0
    %333 = vmatprep.mubr.f32.mxu0 0.0
    %334 = vmatmul.mubr.f32.gmra.mxu0 %v267
    %v335 = vpop.f32.mrf.mxu0
    %v336 = vadd.f32 0.0, %v335
    %v337 = vpop.f32.mrf.mxu0
    %338 = vdwg.mxu0
    %v339 = vadd.f32 %v265, %v336
    %v340 = vtanh.pop %v339
    %v341 = vld [vmem:[%s73] sm:$0x3]
    %v343 = vsel %vm113, %v340, 0
    %345 = vmatprep.subr.mxu0 0.0
    %346 = vmatpush1.msra.mxu0 0.0
    %347 = vmatprep.subr.mxu0 0.0
    %348 = vmatpush1.msra.mxu0 0.0
    %349 = vmatprep.subr.mxu0 0.0
    %350 = vmatpush1.msra.mxu0 0.0
    %351 = vmatprep.subr.mxu0 0.0
    %352 = vmatpush1.msra.mxu0 0.0
    %353 = vmatprep.subr.mxu0 0.0
    %354 = vmatpush1.msra.mxu0 0.0
    %355 = vmatprep.subr.mxu0 0.0
    %356 = vmatpush1.msra.mxu0 0.0
    %357 = vmatprep.subr.mxu0 0.0
    %358 = vmatpush1.msra.mxu0 0.0
    %359 = vmatprep.subr.mxu0 0.0
    %360 = vmatpush1.msra.mxu0 0.0
    %361 = vmatprep.subr.mxu0 0.0
    %362 = vmatpush1.msra.mxu0 0.0
    %363 = vmatprep.subr.mxu0 0.0
    %364 = vmatpush1.msra.mxu0 0.0
    %365 = vmatprep.subr.mxu0 0.0
    %366 = vmatpush1.msra.mxu0 0.0
    %367 = vmatprep.subr.mxu0 0.0
    %368 = vmatpush1.msra.mxu0 0.0
    %369 = vmatprep.subr.mxu0 0.0
    %370 = vmatpush1.msra.mxu0 %v109
    %371 = vmatprep.subr.mxu0 0.0
    %372 = vmatpush1.msra.mxu0 %v108
    %373 = vmatprep.subr.mxu0 0.0
    %374 = vmatpush1.msra.mxu0 %v107
    %375 = vmatprep.subr.mxu0 0.0
    %376 = vmatpush1.msra.mxu0 %v106
    %377 = vmatprep.subr.mxu0 0.0
    %378 = vmatpush2.msra.mxu0 0.0
    %379 = vmatprep.subr.mxu0 0.0
    %380 = vmatpush2.msra.mxu0 0.0
    %381 = vmatprep.subr.mxu0 0.0
    %382 = vmatpush2.msra.mxu0 0.0
    %383 = vmatprep.subr.mxu0 0.0
    %384 = vmatpush2.msra.mxu0 0.0
    %385 = vmatprep.subr.mxu0 0.0
    %386 = vmatpush2.msra.mxu0 0.0
    %387 = vmatprep.subr.mxu0 0.0
    %388 = vmatpush2.msra.mxu0 0.0
    %389 = vmatprep.subr.mxu0 0.0
    %390 = vmatpush2.msra.mxu0 0.0
    %391 = vmatprep.subr.mxu0 0.0
    %392 = vmatpush2.msra.mxu0 0.0
    %393 = vmatprep.subr.mxu0 0.0
    %394 = vmatpush2.msra.mxu0 0.0
    %395 = vmatprep.subr.mxu0 0.0
    %396 = vmatpush2.msra.mxu0 0.0
    %397 = vmatprep.subr.mxu0 0.0
    %398 = vmatpush2.msra.mxu0 0.0
    %399 = vmatprep.subr.mxu0 0.0
    %400 = vmatpush2.msra.mxu0 0.0
    %401 = vmatprep.subr.mxu0 0.0
    %402 = vmatpush2.msra.mxu0 0.0
    %403 = vmatprep.subr.mxu0 0.0
    %404 = vmatpush2.msra.mxu0 0.0
    %405 = vmatprep.subr.mxu0 0.0
    %406 = vmatpush2.msra.mxu0 0.0
    %407 = vmatprep.subr.mxu0 0.0
    %408 = vmatpush2.msra.mxu0 0.0
    %409 = vmatprep.mubr.f32.mxu0 0.0
    %410 = vmatmul.mubr.f32.gmra.mxu0 %v343
    %v411 = vpop.f32.mrf.mxu0
    %v412 = vadd.f32 0.0, %v411
    %v413 = vpop.f32.mrf.mxu0
    %414 = vdwg.mxu0
    %v415 = vadd.f32 %v341, %v412
    %v416 = vtanh.pop %v415
    %v417 = vld [vmem:[%s82] sm:$0x3]
    %v419 = vsel %vm113, %v416, 0
    %421 = vmatprep.subr.mxu0 0.0
    %422 = vmatpush1.msra.mxu0 0.0
    %423 = vmatprep.subr.mxu0 0.0
    %424 = vmatpush1.msra.mxu0 0.0
    %425 = vmatprep.subr.mxu0 0.0
    %426 = vmatpush1.msra.mxu0 0.0
    %427 = vmatprep.subr.mxu0 0.0
    %428 = vmatpush1.msra.mxu0 0.0
    %429 = vmatprep.subr.mxu0 0.0
    %430 = vmatpush1.msra.mxu0 0.0
    %431 = vmatprep.subr.mxu0 0.0
    %432 = vmatpush1.msra.mxu0 0.0
    %433 = vmatprep.subr.mxu0 0.0
    %434 = vmatpush1.msra.mxu0 0.0
    %435 = vmatprep.subr.mxu0 0.0
    %436 = vmatpush1.msra.mxu0 0.0
    %437 = vmatprep.subr.mxu0 0.0
    %438 = vmatpush1.msra.mxu0 0.0
    %439 = vmatprep.subr.mxu0 0.0
    %440 = vmatpush1.msra.mxu0 0.0
    %441 = vmatprep.subr.mxu0 0.0
    %442 = vmatpush1.msra.mxu0 0.0
    %443 = vmatprep.subr.mxu0 0.0
    %444 = vmatpush1.msra.mxu0 0.0
    %445 = vmatprep.subr.mxu0 0.0
    %446 = vmatpush1.msra.mxu0 %v109
    %447 = vmatprep.subr.mxu0 0.0
    %448 = vmatpush1.msra.mxu0 %v108
    %449 = vmatprep.subr.mxu0 0.0
    %450 = vmatpush1.msra.mxu0 %v107
    %451 = vmatprep.subr.mxu0 0.0
    %452 = vmatpush1.msra.mxu0 %v106
    %453 = vmatprep.subr.mxu0 0.0
    %454 = vmatpush2.msra.mxu0 0.0
    %455 = vmatprep.subr.mxu0 0.0
    %456 = vmatpush2.msra.mxu0 0.0
    %457 = vmatprep.subr.mxu0 0.0
    %458 = vmatpush2.msra.mxu0 0.0
    %459 = vmatprep.subr.mxu0 0.0
    %460 = vmatpush2.msra.mxu0 0.0
    %461 = vmatprep.subr.mxu0 0.0
    %462 = vmatpush2.msra.mxu0 0.0
    %463 = vmatprep.subr.mxu0 0.0
    %464 = vmatpush2.msra.mxu0 0.0
    %465 = vmatprep.subr.mxu0 0.0
    %466 = vmatpush2.msra.mxu0 0.0
    %467 = vmatprep.subr.mxu0 0.0
    %468 = vmatpush2.msra.mxu0 0.0
    %469 = vmatprep.subr.mxu0 0.0
    %470 = vmatpush2.msra.mxu0 0.0
    %471 = vmatprep.subr.mxu0 0.0
    %472 = vmatpush2.msra.mxu0 0.0
    %473 = vmatprep.subr.mxu0 0.0
    %474 = vmatpush2.msra.mxu0 0.0
    %475 = vmatprep.subr.mxu0 0.0
    %476 = vmatpush2.msra.mxu0 0.0
    %477 = vmatprep.subr.mxu0 0.0
    %478 = vmatpush2.msra.mxu0 0.0
    %479 = vmatprep.subr.mxu0 0.0
    %480 = vmatpush2.msra.mxu0 0.0
    %481 = vmatprep.subr.mxu0 0.0
    %482 = vmatpush2.msra.mxu0 0.0
    %483 = vmatprep.subr.mxu0 0.0
    %484 = vmatpush2.msra.mxu0 0.0
    %485 = vmatprep.mubr.f32.mxu0 0.0
    %486 = vmatmul.mubr.f32.gmra.mxu0 %v419
    %v487 = vpop.f32.mrf.mxu0
    %v488 = vadd.f32 0.0, %v487
    %v489 = vpop.f32.mrf.mxu0
    %490 = vdwg.mxu0
    %v491 = vadd.f32 %v417, %v488
    %v492 = vtanh.pop %v491
    %v493 = vld [vmem:[%s91] sm:$0x3]
    %v495 = vsel %vm113, %v492, 0
    %497 = vmatprep.subr.mxu0 0.0
    %498 = vmatpush1.msra.mxu0 0.0
    %499 = vmatprep.subr.mxu0 0.0
    %500 = vmatpush1.msra.mxu0 0.0
    %501 = vmatprep.subr.mxu0 0.0
    %502 = vmatpush1.msra.mxu0 0.0
    %503 = vmatprep.subr.mxu0 0.0
    %504 = vmatpush1.msra.mxu0 0.0
    %505 = vmatprep.subr.mxu0 0.0
    %506 = vmatpush1.msra.mxu0 0.0
    %507 = vmatprep.subr.mxu0 0.0
    %508 = vmatpush1.msra.mxu0 0.0
    %509 = vmatprep.subr.mxu0 0.0
    %510 = vmatpush1.msra.mxu0 0.0
    %511 = vmatprep.subr.mxu0 0.0
    %512 = vmatpush1.msra.mxu0 0.0
    %513 = vmatprep.subr.mxu0 0.0
    %514 = vmatpush1.msra.mxu0 0.0
    %515 = vmatprep.subr.mxu0 0.0
    %516 = vmatpush1.msra.mxu0 0.0
    %517 = vmatprep.subr.mxu0 0.0
    %518 = vmatpush1.msra.mxu0 0.0
    %519 = vmatprep.subr.mxu0 0.0
    %520 = vmatpush1.msra.mxu0 0.0
    %521 = vmatprep.subr.mxu0 0.0
    %522 = vmatpush1.msra.mxu0 %v109
    %523 = vmatprep.subr.mxu0 0.0
    %524 = vmatpush1.msra.mxu0 %v108
    %525 = vmatprep.subr.mxu0 0.0
    %526 = vmatpush1.msra.mxu0 %v107
    %527 = vmatprep.subr.mxu0 0.0
    %528 = vmatpush1.msra.mxu0 %v106
    %529 = vmatprep.subr.mxu0 0.0
    %530 = vmatpush2.msra.mxu0 0.0
    %531 = vmatprep.subr.mxu0 0.0
    %532 = vmatpush2.msra.mxu0 0.0
    %533 = vmatprep.subr.mxu0 0.0
    %534 = vmatpush2.msra.mxu0 0.0
    %535 = vmatprep.subr.mxu0 0.0
    %536 = vmatpush2.msra.mxu0 0.0
    %537 = vmatprep.subr.mxu0 0.0
    %538 = vmatpush2.msra.mxu0 0.0
    %539 = vmatprep.subr.mxu0 0.0
    %540 = vmatpush2.msra.mxu0 0.0
    %541 = vmatprep.subr.mxu0 0.0
    %542 = vmatpush2.msra.mxu0 0.0
    %543 = vmatprep.subr.mxu0 0.0
    %544 = vmatpush2.msra.mxu0 0.0
    %545 = vmatprep.subr.mxu0 0.0
    %546 = vmatpush2.msra.mxu0 0.0
    %547 = vmatprep.subr.mxu0 0.0
    %548 = vmatpush2.msra.mxu0 0.0
    %549 = vmatprep.subr.mxu0 0.0
    %550 = vmatpush2.msra.mxu0 0.0
    %551 = vmatprep.subr.mxu0 0.0
    %552 = vmatpush2.msra.mxu0 0.0
    %553 = vmatprep.subr.mxu0 0.0
    %554 = vmatpush2.msra.mxu0 0.0
    %555 = vmatprep.subr.mxu0 0.0
    %556 = vmatpush2.msra.mxu0 0.0
    %557 = vmatprep.subr.mxu0 0.0
    %558 = vmatpush2.msra.mxu0 0.0
    %559 = vmatprep.subr.mxu0 0.0
    %560 = vmatpush2.msra.mxu0 0.0
    %561 = vmatprep.mubr.f32.mxu0 0.0
    %562 = vmatmul.mubr.f32.gmra.mxu0 %v495
    %v563 = vpop.f32.mrf.mxu0
    %v564 = vadd.f32 0.0, %v563
    %v565 = vpop.f32.mrf.mxu0
    %566 = vdwg.mxu0
    %v567 = vadd.f32 %v493, %v564
    %v568 = vtanh.pop %v567
    %v569 = vld [vmem:[%s100] sm:$0x3]
    %v571 = vsel %vm113, %v568, 0
    %573 = vmatprep.subr.mxu0 0.0
    %574 = vmatpush1.msra.mxu0 0.0
    %575 = vmatprep.subr.mxu0 0.0
    %576 = vmatpush1.msra.mxu0 0.0
    %577 = vmatprep.subr.mxu0 0.0
    %578 = vmatpush1.msra.mxu0 0.0
    %579 = vmatprep.subr.mxu0 0.0
    %580 = vmatpush1.msra.mxu0 0.0
    %581 = vmatprep.subr.mxu0 0.0
    %582 = vmatpush1.msra.mxu0 0.0
    %583 = vmatprep.subr.mxu0 0.0
    %584 = vmatpush1.msra.mxu0 0.0
    %585 = vmatprep.subr.mxu0 0.0
    %586 = vmatpush1.msra.mxu0 0.0
    %587 = vmatprep.subr.mxu0 0.0
    %588 = vmatpush1.msra.mxu0 0.0
    %589 = vmatprep.subr.mxu0 0.0
    %590 = vmatpush1.msra.mxu0 0.0
    %591 = vmatprep.subr.mxu0 0.0
    %592 = vmatpush1.msra.mxu0 0.0
    %593 = vmatprep.subr.mxu0 0.0
    %594 = vmatpush1.msra.mxu0 0.0
    %595 = vmatprep.subr.mxu0 0.0
    %596 = vmatpush1.msra.mxu0 0.0
    %597 = vmatprep.subr.mxu0 0.0
    %598 = vmatpush1.msra.mxu0 %v109
    %599 = vmatprep.subr.mxu0 0.0
    %600 = vmatpush1.msra.mxu0 %v108
    %601 = vmatprep.subr.mxu0 0.0
    %602 = vmatpush1.msra.mxu0 %v107
    %603 = vmatprep.subr.mxu0 0.0
    %604 = vmatpush1.msra.mxu0 %v106
    %605 = vmatprep.subr.mxu0 0.0
    %606 = vmatpush2.msra.mxu0 0.0
    %607 = vmatprep.subr.mxu0 0.0
    %608 = vmatpush2.msra.mxu0 0.0
    %609 = vmatprep.subr.mxu0 0.0
    %610 = vmatpush2.msra.mxu0 0.0
    %611 = vmatprep.subr.mxu0 0.0
    %612 = vmatpush2.msra.mxu0 0.0
    %613 = vmatprep.subr.mxu0 0.0
    %614 = vmatpush2.msra.mxu0 0.0
    %615 = vmatprep.subr.mxu0 0.0
    %616 = vmatpush2.msra.mxu0 0.0
    %617 = vmatprep.subr.mxu0 0.0
    %618 = vmatpush2.msra.mxu0 0.0
    %619 = vmatprep.subr.mxu0 0.0
    %620 = vmatpush2.msra.mxu0 0.0
    %621 = vmatprep.subr.mxu0 0.0
    %622 = vmatpush2.msra.mxu0 0.0
    %623 = vmatprep.subr.mxu0 0.0
    %624 = vmatpush2.msra.mxu0 0.0
    %625 = vmatprep.subr.mxu0 0.0
    %626 = vmatpush2.msra.mxu0 0.0
    %627 = vmatprep.subr.mxu0 0.0
    %628 = vmatpush2.msra.mxu0 0.0
    %629 = vmatprep.subr.mxu0 0.0
    %630 = vmatpush2.msra.mxu0 0.0
    %631 = vmatprep.subr.mxu0 0.0
    %632 = vmatpush2.msra.mxu0 0.0
    %633 = vmatprep.subr.mxu0 0.0
    %634 = vmatpush2.msra.mxu0 0.0
    %635 = vmatprep.subr.mxu0 0.0
    %636 = vmatpush2.msra.mxu0 0.0
    %637 = vmatprep.mubr.f32.mxu0 0.0
    %638 = vmatmul.mubr.f32.gmra.mxu0 %v571
    %v639 = vpop.f32.mrf.mxu0
    %v640 = vadd.f32 0.0, %v639
    %v641 = vpop.f32.mrf.mxu0
    %642 = vdwg.mxu0
    %v643 = vadd.f32 %v569, %v640
    %v644 = vtanh.pop %v643
    %v645 = vld [vmem:[%s3] sm:$0xff]
    %v646 = vld [vmem:[%s3 + $0x8] sm:$0xff]
    %v647 = vld [vmem:[%s3 + $0x10] sm:$0xff]
    %v648 = vld [vmem:[%s3 + $0x18] sm:$0xff]
    %v649 = vld [vmem:[%s4] sm:$0x1]
    %v651 = vlaneseq
    %v652 = vshrl.u32 %v651, 7
    %v653 = vsub.s32 0, %v652
    %v654 = vrot.slane %v649, %v653
    %v657 = vsel %vm113, %v644, 0
    %659 = vmatprep.subr.mxu0 0.0
    %660 = vmatpush1.msra.mxu0 0.0
    %661 = vmatprep.subr.mxu0 0.0
    %662 = vmatpush1.msra.mxu0 0.0
    %663 = vmatprep.subr.mxu0 0.0
    %664 = vmatpush1.msra.mxu0 0.0
    %665 = vmatprep.subr.mxu0 0.0
    %666 = vmatpush1.msra.mxu0 0.0
    %667 = vmatprep.subr.mxu0 0.0
    %668 = vmatpush1.msra.mxu0 0.0
    %669 = vmatprep.subr.mxu0 0.0
    %670 = vmatpush1.msra.mxu0 0.0
    %671 = vmatprep.subr.mxu0 0.0
    %672 = vmatpush1.msra.mxu0 0.0
    %673 = vmatprep.subr.mxu0 0.0
    %674 = vmatpush1.msra.mxu0 0.0
    %675 = vmatprep.subr.mxu0 0.0
    %676 = vmatpush1.msra.mxu0 0.0
    %677 = vmatprep.subr.mxu0 0.0
    %678 = vmatpush1.msra.mxu0 0.0
    %679 = vmatprep.subr.mxu0 0.0
    %680 = vmatpush1.msra.mxu0 0.0
    %681 = vmatprep.subr.mxu0 0.0
    %682 = vmatpush1.msra.mxu0 0.0
    %683 = vmatprep.subr.mxu0 0.0
    %684 = vmatpush1.msra.mxu0 %v648
    %685 = vmatprep.subr.mxu0 0.0
    %686 = vmatpush1.msra.mxu0 %v647
    %687 = vmatprep.subr.mxu0 0.0
    %688 = vmatpush1.msra.mxu0 %v646
    %689 = vmatprep.subr.mxu0 0.0
    %690 = vmatpush1.msra.mxu0 %v645
    %691 = vmatprep.subr.mxu0 0.0
    %692 = vmatpush2.msra.mxu0 0.0
    %693 = vmatprep.subr.mxu0 0.0
    %694 = vmatpush2.msra.mxu0 0.0
    %695 = vmatprep.subr.mxu0 0.0
    %696 = vmatpush2.msra.mxu0 0.0
    %697 = vmatprep.subr.mxu0 0.0
    %698 = vmatpush2.msra.mxu0 0.0
    %699 = vmatprep.subr.mxu0 0.0
    %700 = vmatpush2.msra.mxu0 0.0
    %701 = vmatprep.subr.mxu0 0.0
    %702 = vmatpush2.msra.mxu0 0.0
    %703 = vmatprep.subr.mxu0 0.0
    %704 = vmatpush2.msra.mxu0 0.0
    %705 = vmatprep.subr.mxu0 0.0
    %706 = vmatpush2.msra.mxu0 0.0
    %707 = vmatprep.subr.mxu0 0.0
    %708 = vmatpush2.msra.mxu0 0.0
    %709 = vmatprep.subr.mxu0 0.0
    %710 = vmatpush2.msra.mxu0 0.0
    %711 = vmatprep.subr.mxu0 0.0
    %712 = vmatpush2.msra.mxu0 0.0
    %713 = vmatprep.subr.mxu0 0.0
    %714 = vmatpush2.msra.mxu0 0.0
    %715 = vmatprep.subr.mxu0 0.0
    %716 = vmatpush2.msra.mxu0 0.0
    %717 = vmatprep.subr.mxu0 0.0
    %718 = vmatpush2.msra.mxu0 0.0
    %719 = vmatprep.subr.mxu0 0.0
    %720 = vmatpush2.msra.mxu0 0.0
    %721 = vmatprep.subr.mxu0 0.0
    %722 = vmatpush2.msra.mxu0 0.0
    %723 = vmatprep.mubr.f32.mxu0 0.0
    %724 = vmatmul.mubr.f32.gmra.mxu0 %v657
    %v725 = vpop.f32.mrf.mxu0
    %v726 = vadd.f32 %v654, %v725
    %v727 = vpop.f32.mrf.mxu0
    %728 = vdwg.mxu0
    %vm729 = vcmask 25600
    %730 = vst.msk [vmem:[#allocation6] sm:$0x3] %vm729, %v726
    // Predicated region
    $region26: #{tpu_custom_call.1} parent=1 // pred_check
      _
    $region27: #{tpu_custom_call.1} parent=1 // pred_check_branch
      %732 = sbr.rel (0) target = $region29
    $region28: #{tpu_custom_call.1} parent=1 // pred_region
      %s734 = ssub.s32 32, 32
      %735 = vsyncadd [#allocation4], %s734
      %s737 = sshll.u32 [#allocation6], 4
      %s738 = int_to_ptr.vmem [resolvable:$true] %s737
      %740 = dma.vmem_to_hbm [thread:$0]  %s738, 32, %s5, [#allocation4]
    $region29: #{tpu_custom_call.1} parent=1 // pred_fallthru
      _
    // Predicated region
    $region30: #{tpu_custom_call.1} parent=1 // pred_check
      _
    $region31: #{tpu_custom_call.1} parent=1 // pred_check_branch
      %742 = sbr.rel (0) target = $region33
    $region32: #{tpu_custom_call.1} parent=1 // pred_region
      %743 = dma.done [#allocation4], 32
    $region33: #{tpu_custom_call.1} parent=1 // pred_fallthru
      _
    %744 = vsyncpa [#allocation4], 1
    %745 = vsyncpa [#allocation5], 1

</llo_original>
